<compile_context>
chip_gen: v5e
topology: v5e:2x2
jax: 0.10.0
libtpu: 0.0.40
codegen_flags: <defaults>
</compile_context>

<pallas_src>
import jax
import jax.numpy as jnp
from jax.experimental import pallas as pl
from jax.experimental.pallas import tpu as pltpu


# ---------------------------------------------------------------------------
# Kernel
# ---------------------------------------------------------------------------
def _policy_mlp_kernel(x_ref,
                       w1_ref, b1_ref,
                       w2_ref, b2_ref,
                       w3_ref, b3_ref,
                       o_ref):
    """Fused 3-layer MLP (Linear->ReLU->Linear->ReLU->Linear) on a tile of rows.

    Matmuls run on the MXU in the weight dtype (bf16 default / f32) with f32
    accumulation; bias-add and ReLU run on the VPU in f32.  The cast of the
    f32 activations to the MXU dtype happens here (free VPU work) rather than
    in a separate wrapper-side XLA pass.
    """
    x = x_ref[...].astype(w1_ref.dtype)                              # (tm, S)

    # Layer 1: (tm, S) @ (S, Hp) + (1, Hp) -> ReLU
    h = jnp.dot(x, w1_ref[...], preferred_element_type=jnp.float32) + b1_ref[...]
    h = jnp.maximum(h, 0.0).astype(w2_ref.dtype)

    # Layer 2: (tm, Hp) @ (Hp, Hp) + (1, Hp) -> ReLU
    h = jnp.dot(h, w2_ref[...], preferred_element_type=jnp.float32) + b2_ref[...]
    h = jnp.maximum(h, 0.0).astype(w3_ref.dtype)

    # Output layer: (tm, Hp) @ (Hp, Ap) + (1, Ap)  (lane-dense store)
    o_ref[...] = (jnp.dot(h, w3_ref[...], preferred_element_type=jnp.float32)
                  + b3_ref[...]).astype(o_ref.dtype)


# ---------------------------------------------------------------------------
# Parameter preparation (run once at model-load time, cache the result)
# ---------------------------------------------------------------------------
def _round_up(x, m):
    return (x + m - 1) // m * m


def _pad2d(a, rows, cols):
    r, c = a.shape
    if r == rows and c == cols:
        return a
    return jnp.pad(a, ((0, rows - r), (0, cols - c)))


def prepare_params(params, *, mxu_dtype=jnp.bfloat16):
    """Pad feature dims to multiples of 128 (lane-dense MXU / stores) and cast
    the weights to the MXU dtype, ONCE.  w1 keeps its native row count (S) so
    the activations never need wrapper-side padding; padded rows/cols are zero
    so the result is numerically exact.  Biases stay f32 (VPU epilogue)."""
    S, H = params["w1"].shape
    A = params["w3"].shape[1]
    Hp = _round_up(H, 128)
    Ap = _round_up(A, 128)
    prepared = {
        "w1": _pad2d(params["w1"], S, Hp).astype(mxu_dtype),
        "w2": _pad2d(params["w2"], Hp, Hp).astype(mxu_dtype),
        "w3": _pad2d(params["w3"], Hp, Ap).astype(mxu_dtype),
        "b1": _pad2d(params["b1"].reshape(1, -1), 1, Hp).astype(jnp.float32),
        "b2": _pad2d(params["b2"].reshape(1, -1), 1, Hp).astype(jnp.float32),
        "b3": _pad2d(params["b3"].reshape(1, -1), 1, Ap).astype(jnp.float32),
    }
    meta = dict(S=S, H=H, A=A, Hp=Hp, Ap=Ap,
                mxu_bytes=jnp.dtype(mxu_dtype).itemsize)
    return prepared, meta


# ---------------------------------------------------------------------------
# Wrapper
# ---------------------------------------------------------------------------
def _default_max_row_tile():
    # 1024-row tiles on 128 MiB-VMEM chips (v5e/v6e); 512 on v7x (64 MiB VMEM,
    # and smaller tiles keep >= 2 grid steps for its two TensorCores).
    try:
        vmem = pltpu.get_tpu_info().vmem_capacity_bytes
        return 512 if vmem <= (64 << 20) else 1024
    except Exception:
        return 512


def _pick_row_tile(M, max_row_tile):
    """Multiple of 8; guarantees >= 2 grid steps for nontrivial batches so the
    "parallel" row axis has work for both v7x TensorCores, capped for VMEM."""
    M8 = _round_up(max(M, 1), 8)
    half = _round_up(pl.cdiv(M8, 2), 8)
    return max(8, min(max_row_tile, half))


def policy_logits_pallas(obs, prepared, meta, *, max_row_tile=None,
                         out_dtype=jnp.float32):
    """obs: (..., state_dim) float  ->  logits (..., act_dim)  (= net(obs))."""
    S, A, Hp, Ap = meta["S"], meta["A"], meta["Hp"], meta["Ap"]
    assert obs.shape[-1] == S, (obs.shape, S)
    lead = obs.shape[:-1]
    x = obs.reshape(-1, S)          # no pad, no cast: done inside the kernel
    M = x.shape[0]
    if M == 0:
        return jnp.zeros((*lead, A), out_dtype)

    if max_row_tile is None:
        max_row_tile = _default_max_row_tile()
    tm = _pick_row_tile(M, max_row_tile)
    grid = (pl.cdiv(M, tm),)        # partial last block is masked by Pallas

    wb = meta["mxu_bytes"]
    xb = jnp.dtype(x.dtype).itemsize
    ob = jnp.dtype(out_dtype).itemsize
    weight_bytes = (S * Hp + Hp * Hp + Hp * Ap) * wb + (2 * Hp + Ap) * 4

    # Advisory cost estimate: lets XLA overlap surrounding ops with the call.
    cost = pl.CostEstimate(
        flops=2 * M * (S * Hp + Hp * Hp + Hp * Ap),
        transcendentals=0,
        bytes_accessed=weight_bytes + M * S * xb + M * Ap * ob)

    # VMEM budget: single-buffered weights + double-buffered activation tiles
    # + f32 intermediates, with headroom; clamped to stay v7x-safe.
    vmem_needed = (weight_bytes
                   + 2 * tm * S * xb
                   + 2 * tm * Ap * ob
                   + 3 * tm * Hp * 4)
    vmem_limit = min(max(int(1.5 * vmem_needed) + (8 << 20), 32 << 20), 64 << 20)

    def resident(shape):
        # Constant block index -> DMA'd exactly once; single buffer halves the
        # weights' VMEM footprint (important on v7x, harmless on v5e/v6e).
        return pl.BlockSpec(shape, lambda i: (0, 0),
                            pipeline_mode=pl.Buffered(buffer_count=1))

    out = pl.pallas_call(
        _policy_mlp_kernel,
        out_shape=jax.ShapeDtypeStruct((M, Ap), out_dtype),
        grid=grid,
        in_specs=[
            pl.BlockSpec((tm, S), lambda i: (i, 0)),    # row-tiled activations
            resident((S, Hp)), resident((1, Hp)),       # layer 1
            resident((Hp, Hp)), resident((1, Hp)),      # layer 2
            resident((Hp, Ap)), resident((1, Ap)),      # output layer
        ],
        out_specs=pl.BlockSpec((tm, Ap), lambda i: (i, 0)),
        compiler_params=pltpu.CompilerParams(
            dimension_semantics=("parallel",),          # megacore on v7x
            vmem_limit_bytes=vmem_limit),
        cost_estimate=cost,
    )(x, prepared["w1"], prepared["b1"], prepared["w2"], prepared["b2"],
      prepared["w3"], prepared["b3"])

    return out[:, :A].reshape(*lead, A)


# ---------------------------------------------------------------------------
# Parameter init (mirrors the PyTorch module's init for the test)
# ---------------------------------------------------------------------------
def init_policy_params(key, state_dim, hidden_dim, act_dim):
    """Hidden Linears: PyTorch default U(-1/sqrt(fan_in), 1/sqrt(fan_in)).
    Output layer weight: xavier_uniform_(gain=0.01) per init_module_weights(net[-1], False)."""
    dims = [(state_dim, hidden_dim), (hidden_dim, hidden_dim), (hidden_dim, act_dim)]
    params = {}
    for li, (fan_in, fan_out) in enumerate(dims, start=1):
        key, kw, kb = jax.random.split(key, 3)
        if li == len(dims):
            bound_w = 0.01 * float(jnp.sqrt(6.0 / (fan_in + fan_out)))  # xavier_uniform, gain=0.01
        else:
            bound_w = 1.0 / float(jnp.sqrt(jnp.float32(fan_in)))
        bound_b = 1.0 / float(jnp.sqrt(jnp.float32(fan_in)))
        params[f"w{li}"] = jax.random.uniform(
            kw, (fan_in, fan_out), jnp.float32, -bound_w, bound_w)
        params[f"b{li}"] = jax.random.uniform(
            kb, (1, fan_out), jnp.float32, -bound_b, bound_b)
    return params


def reference_forward(obs, params):
    """Pure-JAX reference of net(obs) for correctness checking."""
    hi = jax.lax.Precision.HIGHEST
    h = jax.nn.relu(jnp.dot(obs, params["w1"], precision=hi) + params["b1"])
    h = jax.nn.relu(jnp.dot(h, params["w2"], precision=hi) + params["b2"])
    return jnp.dot(h, params["w3"], precision=hi) + params["b3"]


# TODO(synk): the MLP helper class is not included in the spec; the CORL-style
# default activation (nn.ReLU, no dropout) is assumed here.
# TODO(synk): MaskedCategorical sampling / log-prob / argmax (log_prob /
# evaluate / act) is a tiny epilogue on the logits and stays outside the kernel.
# NOTE: in the bf16 path inter-layer activations are quantized to bf16, so it
# is not bit-identical to the f32 PyTorch MLP (validated to 3e-2 below).

if __name__ == "__main__":
    # Small shapes consistent with the module: batch=4, state_dim=32,
    # hidden_dim=64 (module default is 256), act_dim=16 discrete actions.
    B, STATE_DIM, HIDDEN, ACT_DIM = 4, 32, 64, 16

    root = jax.random.PRNGKey(0)
    k_obs, k_obs2, k_params = jax.random.split(root, 3)

    obs = jax.random.normal(k_obs, (B, STATE_DIM), jnp.float32)
    params = init_policy_params(k_params, STATE_DIM, HIDDEN, ACT_DIM)
    ref = jax.block_until_ready(reference_forward(obs, params))

    # Default path: bf16 MXU operands, f32 accumulation + f32 bias/ReLU epilogue.
    prep_bf16, meta_bf16 = prepare_params(params)                 # cache at load time
    out_bf16 = jax.block_until_ready(policy_logits_pallas(obs, prep_bf16, meta_bf16))
    assert out_bf16.shape == (B, ACT_DIM), out_bf16.shape
    assert jnp.allclose(out_bf16, ref, atol=3e-2, rtol=3e-2), (out_bf16, ref)

    # f32 MXU path for tight numerics checking.
    prep_f32, meta_f32 = prepare_params(params, mxu_dtype=jnp.float32)
    out_f32 = jax.block_until_ready(policy_logits_pallas(obs, prep_f32, meta_f32))
    assert out_f32.shape == (B, ACT_DIM), out_f32.shape
    assert jnp.allclose(out_f32, ref, atol=1e-3, rtol=1e-3), (out_f32, ref)

    # Exercise 3-D leading dims, a multi-step row grid, and a partial last block.
    obs2 = jax.random.normal(k_obs2, (3, 7, STATE_DIM), jnp.float32)
    ref2 = reference_forward(obs2, params)
    out2 = jax.block_until_ready(
        policy_logits_pallas(obs2, prep_f32, meta_f32, max_row_tile=16))
    assert out2.shape == (3, 7, ACT_DIM), out2.shape
    assert jnp.allclose(out2, ref2, atol=1e-3, rtol=1e-3), (out2, ref2)

    print("KERNEL_OK")
</pallas_src>

<mosaic_0001>
module attributes {stable_mosaic.version = 11 : i64} {
  func.func @_policy_mlp_kernel(%arg0: i32, %arg1: memref<8x32xf32, #tpu.memory_space<vmem>>, %arg2: memref<32x128xbf16, #tpu.memory_space<vmem>>, %arg3: memref<1x128xf32, #tpu.memory_space<vmem>>, %arg4: memref<128x128xbf16, #tpu.memory_space<vmem>>, %arg5: memref<1x128xf32, #tpu.memory_space<vmem>>, %arg6: memref<128x128xbf16, #tpu.memory_space<vmem>>, %arg7: memref<1x128xf32, #tpu.memory_space<vmem>>, %arg8: memref<8x128xf32, #tpu.memory_space<vmem>>) attributes {dimension_semantics = [#tpu.dimension_semantics<parallel>], iteration_bounds = array<i64: 1>, scalar_prefetch = 0 : i64, scratch_operands = 0 : i64, tpu.core_type = #tpu.core_type<tc>, window_params = [{transform_indices = @transform_0, window_bounds = array<i64: 8, 32>}, {pipeline_mode = #tpu.pipeline_mode<synchronous>, transform_indices = @transform_1, window_bounds = array<i64: 32, 128>}, {pipeline_mode = #tpu.pipeline_mode<synchronous>, transform_indices = @transform_2, window_bounds = array<i64: 1, 128>}, {pipeline_mode = #tpu.pipeline_mode<synchronous>, transform_indices = @transform_3, window_bounds = array<i64: 128, 128>}, {pipeline_mode = #tpu.pipeline_mode<synchronous>, transform_indices = @transform_4, window_bounds = array<i64: 1, 128>}, {pipeline_mode = #tpu.pipeline_mode<synchronous>, transform_indices = @transform_5, window_bounds = array<i64: 128, 128>}, {pipeline_mode = #tpu.pipeline_mode<synchronous>, transform_indices = @transform_6, window_bounds = array<i64: 1, 128>}, {transform_indices = @transform_7, window_bounds = array<i64: 8, 128>}]} {
    %c0 = arith.constant 0 : index
    %c0_0 = arith.constant 0 : index
    %0 = vector.load %arg1[%c0, %c0_0] : memref<8x32xf32, #tpu.memory_space<vmem>>, vector<8x32xf32>
    %1 = arith.truncf %0 : vector<8x32xf32> to vector<8x32xbf16>
    %c0_1 = arith.constant 0 : index
    %c0_2 = arith.constant 0 : index
    %2 = vector.load %arg2[%c0_1, %c0_2] : memref<32x128xbf16, #tpu.memory_space<vmem>>, vector<32x128xbf16>
    %cst = arith.constant dense<0.000000e+00> : vector<8x128xf32>
    %3 = tpu.matmul %1, %2, %cst {dimension_numbers = #tpu.dot_dimension_numbers<[1], [0], [0], [1], [0, 0, 1, 1], [], []>} : vector<8x32xbf16>, vector<32x128xbf16>, vector<8x128xf32> -> vector<8x128xf32>
    %c0_3 = arith.constant 0 : index
    %c0_4 = arith.constant 0 : index
    %4 = vector.load %arg3[%c0_3, %c0_4] : memref<1x128xf32, #tpu.memory_space<vmem>>, vector<1x128xf32>
    %5 = vector.broadcast %4 : vector<1x128xf32> to vector<8x128xf32>
    %6 = arith.addf %3, %5 : vector<8x128xf32>
    %cst_5 = arith.constant 0.000000e+00 : f32
    %7 = vector.broadcast %cst_5 : f32 to vector<8x128xf32>
    %8 = arith.maximumf %6, %7 : vector<8x128xf32>
    %9 = arith.truncf %8 : vector<8x128xf32> to vector<8x128xbf16>
    %c0_6 = arith.constant 0 : index
    %c0_7 = arith.constant 0 : index
    %10 = vector.load %arg4[%c0_6, %c0_7] : memref<128x128xbf16, #tpu.memory_space<vmem>>, vector<128x128xbf16>
    %cst_8 = arith.constant dense<0.000000e+00> : vector<8x128xf32>
    %11 = tpu.matmul %9, %10, %cst_8 {dimension_numbers = #tpu.dot_dimension_numbers<[1], [0], [0], [1], [0, 0, 1, 1], [], []>} : vector<8x128xbf16>, vector<128x128xbf16>, vector<8x128xf32> -> vector<8x128xf32>
    %c0_9 = arith.constant 0 : index
    %c0_10 = arith.constant 0 : index
    %12 = vector.load %arg5[%c0_9, %c0_10] : memref<1x128xf32, #tpu.memory_space<vmem>>, vector<1x128xf32>
    %13 = vector.broadcast %12 : vector<1x128xf32> to vector<8x128xf32>
    %14 = arith.addf %11, %13 : vector<8x128xf32>
    %cst_11 = arith.constant 0.000000e+00 : f32
    %15 = vector.broadcast %cst_11 : f32 to vector<8x128xf32>
    %16 = arith.maximumf %14, %15 : vector<8x128xf32>
    %17 = arith.truncf %16 : vector<8x128xf32> to vector<8x128xbf16>
    %c0_12 = arith.constant 0 : index
    %c0_13 = arith.constant 0 : index
    %18 = vector.load %arg6[%c0_12, %c0_13] : memref<128x128xbf16, #tpu.memory_space<vmem>>, vector<128x128xbf16>
    %cst_14 = arith.constant dense<0.000000e+00> : vector<8x128xf32>
    %19 = tpu.matmul %17, %18, %cst_14 {dimension_numbers = #tpu.dot_dimension_numbers<[1], [0], [0], [1], [0, 0, 1, 1], [], []>} : vector<8x128xbf16>, vector<128x128xbf16>, vector<8x128xf32> -> vector<8x128xf32>
    %c0_15 = arith.constant 0 : index
    %c0_16 = arith.constant 0 : index
    %20 = vector.load %arg7[%c0_15, %c0_16] : memref<1x128xf32, #tpu.memory_space<vmem>>, vector<1x128xf32>
    %21 = vector.broadcast %20 : vector<1x128xf32> to vector<8x128xf32>
    %22 = arith.addf %19, %21 : vector<8x128xf32>
    %c0_17 = arith.constant 0 : index
    %c0_18 = arith.constant 0 : index
    %23 = vector.load %arg8[%c0_17, %c0_18] : memref<8x128xf32, #tpu.memory_space<vmem>>, vector<8x128xf32>
    tpu.vector_store %arg8[%c0_17, %c0_18], %22 {strides = array<i32>} : memref<8x128xf32, #tpu.memory_space<vmem>>, vector<8x128xf32>,
    return
  }
  func.func @transform_0(%arg0: i32) -> (i32, i32) {
    %c0_i32 = arith.constant 0 : i32
    %c0_i32_0 = arith.constant 0 : i32
    return %arg0, %c0_i32 : i32, i32
  }
  func.func @transform_1(%arg0: i32) -> (i32, i32) {
    %c0_i32 = arith.constant 0 : i32
    %c0_i32_0 = arith.constant 0 : i32
    %c0_i32_1 = arith.constant 0 : i32
    return %c0_i32, %c0_i32_0 : i32, i32
  }
  func.func @transform_2(%arg0: i32) -> (i32, i32) {
    %c0_i32 = arith.constant 0 : i32
    %c0_i32_0 = arith.constant 0 : i32
    %c0_i32_1 = arith.constant 0 : i32
    return %c0_i32, %c0_i32_0 : i32, i32
  }
  func.func @transform_3(%arg0: i32) -> (i32, i32) {
    %c0_i32 = arith.constant 0 : i32
    %c0_i32_0 = arith.constant 0 : i32
    %c0_i32_1 = arith.constant 0 : i32
    return %c0_i32, %c0_i32_0 : i32, i32
  }
  func.func @transform_4(%arg0: i32) -> (i32, i32) {
    %c0_i32 = arith.constant 0 : i32
    %c0_i32_0 = arith.constant 0 : i32
    %c0_i32_1 = arith.constant 0 : i32
    return %c0_i32, %c0_i32_0 : i32, i32
  }
  func.func @transform_5(%arg0: i32) -> (i32, i32) {
    %c0_i32 = arith.constant 0 : i32
    %c0_i32_0 = arith.constant 0 : i32
    %c0_i32_1 = arith.constant 0 : i32
    return %c0_i32, %c0_i32_0 : i32, i32
  }
  func.func @transform_6(%arg0: i32) -> (i32, i32) {
    %c0_i32 = arith.constant 0 : i32
    %c0_i32_0 = arith.constant 0 : i32
    %c0_i32_1 = arith.constant 0 : i32
    return %c0_i32, %c0_i32_0 : i32, i32
  }
  func.func @transform_7(%arg0: i32) -> (i32, i32) {
    %c0_i32 = arith.constant 0 : i32
    %c0_i32_0 = arith.constant 0 : i32
    return %arg0, %c0_i32 : i32, i32
  }
}

</mosaic_0001>

<llo_original>
// kernel: tpu_custom_call.1
$region0: #{tpu_custom_call.1}
  #allocation0 [shape = 'u32[]', space=smem, size = 0x4, offset = 0x4, fixed_abs, tag = 'smem constant byte address 0x4 - core index']
  #allocation1 [shape = 'u32[72,128]{1,0:T(1,128)}', space=vmem, size = 0x9000, scoped, tag = 'internal scratch']
  %s0 = inlined_call_operand.hbm [shape: f32[4,32], index: 0, kind: input, shape index: {}]
  %s1 = inlined_call_operand.hbm [shape: bf16[32,128], index: 1, kind: input, shape index: {}]
  %s2 = inlined_call_operand.vmem [shape: f32[1,128], index: 2, kind: input, shape index: {}]
  %s3 = inlined_call_operand.hbm [shape: bf16[128,128], index: 3, kind: input, shape index: {}]
  %s4 = inlined_call_operand.vmem [shape: f32[1,128], index: 4, kind: input, shape index: {}]
  %s5 = inlined_call_operand.hbm [shape: bf16[128,128], index: 5, kind: input, shape index: {}]
  %s6 = inlined_call_operand.vmem [shape: f32[1,128], index: 6, kind: input, shape index: {}]
  %s7 = inlined_call_operand.hbm [shape: f32[4,128], index: 7, kind: output, shape index: {}]
  %s8 = sld [smem:[#allocation0]]
  $region54: #{tpu_custom_call.1} parent=0
    _
  %s10 = ssub.s32 1, %s8
  %s11 = scalar_select 0, %s10, %s8
  $region1: #{tpu_custom_call.1} parent=0
    #allocation2 [shape = 'u8[4096]{0}', space=vmem, size = 0x1000, scoped, tag = 'input window, operand 0, single buffered']
    #allocation3 [shape = 's32[1]{0}', space=sflag, size = 0x4, scoped, tag = 'scoped memory for tpu_custom_call.1']
    #allocation4 [shape = 's32[1]{0}', space=sflag, size = 0x4, scoped, tag = 'scoped memory for tpu_custom_call.1']
    #allocation5 [shape = 'u8[8192]{0}', space=vmem, size = 0x2000, scoped, tag = 'input window, operand 1, single buffered']
    #allocation6 [shape = 's32[1]{0}', space=sflag, size = 0x4, scoped, tag = 'scoped memory for tpu_custom_call.1']
    #allocation7 [shape = 'u8[32768]{0}', space=vmem, size = 0x8000, scoped, tag = 'input window, operand 3, single buffered']
    #allocation8 [shape = 'u8[32768]{0}', space=vmem, size = 0x8000, scoped, tag = 'input window, operand 5, single buffered']
    #allocation9 [shape = 's32[1]{0}', space=sflag, size = 0x4, scoped, tag = 'scoped memory for tpu_custom_call.1']
    #allocation10 [shape = 'u8[4096]{0}', space=vmem, size = 0x1000, scoped, tag = 'output window, operand 0, single buffered']
    %12 = vsyncpa [#allocation3], 0
    %13 = vsyncpa [#allocation6], 0
    %14 = vsyncpa [#allocation9], 0
    %15 = vsyncpa [#allocation4], 0
    // Predicated region
    $region2: #{tpu_custom_call.1} parent=1 // pred_check
      _
    $region3: #{tpu_custom_call.1} parent=1 // pred_check_branch
      %17 = sbr.rel (0) target = $region5
    $region4: #{tpu_custom_call.1} parent=1 // pred_region
      %19 = vsyncadd [#allocation3], 64
      %s20 = sshll.u32 %s0, 4
      %s21 = int_to_ptr.hbm [resolvable:$true] %s20
      %s22 = sshll.u32 [#allocation2], 4
      %s23 = int_to_ptr.vmem [resolvable:$true] %s22
      %28 = dma.hbm_to_vmem [thread:$0]  %s21, 64, %s23, [#allocation3], 64, 64, 4
    $region5: #{tpu_custom_call.1} parent=1 // pred_fallthru
      _
    // Predicated region
    $region6: #{tpu_custom_call.1} parent=1 // pred_check
      _
    $region7: #{tpu_custom_call.1} parent=1 // pred_check_branch
      %30 = sbr.rel (0) target = $region9
    $region8: #{tpu_custom_call.1} parent=1 // pred_region
      %32 = vsyncadd [#allocation6], 0
      %s33 = sshll.u32 %s1, 4
      %s34 = int_to_ptr.hbm [resolvable:$true] %s33
      %s35 = sshll.u32 [#allocation5], 4
      %s36 = int_to_ptr.vmem [resolvable:$true] %s35
      %41 = dma.hbm_to_vmem [thread:$0]  %s34, 256, %s36, [#allocation6], 64, 64, 4
    $region9: #{tpu_custom_call.1} parent=1 // pred_fallthru
      _
    // Predicated region
    $region10: #{tpu_custom_call.1} parent=1 // pred_check
      _
    $region11: #{tpu_custom_call.1} parent=1 // pred_check_branch
      %43 = sbr.rel (0) target = $region13
    $region12: #{tpu_custom_call.1} parent=1 // pred_region
      _
    $region13: #{tpu_custom_call.1} parent=1 // pred_fallthru
      _
    // Predicated region
    $region14: #{tpu_custom_call.1} parent=1 // pred_check
      _
    $region15: #{tpu_custom_call.1} parent=1 // pred_check_branch
      %45 = sbr.rel (0) target = $region17
    $region16: #{tpu_custom_call.1} parent=1 // pred_region
      %47 = vsyncadd [#allocation6], 0
      %s48 = sshll.u32 %s3, 4
      %s49 = int_to_ptr.hbm [resolvable:$true] %s48
      %s50 = sshll.u32 [#allocation7], 4
      %s51 = int_to_ptr.vmem [resolvable:$true] %s50
      %56 = dma.hbm_to_vmem [thread:$0]  %s49, 1024, %s51, [#allocation6], 64, 64, 4
    $region17: #{tpu_custom_call.1} parent=1 // pred_fallthru
      _
    // Predicated region
    $region18: #{tpu_custom_call.1} parent=1 // pred_check
      _
    $region19: #{tpu_custom_call.1} parent=1 // pred_check_branch
      %58 = sbr.rel (0) target = $region21
    $region20: #{tpu_custom_call.1} parent=1 // pred_region
      _
    $region21: #{tpu_custom_call.1} parent=1 // pred_fallthru
      _
    // Predicated region
    $region22: #{tpu_custom_call.1} parent=1 // pred_check
      _
    $region23: #{tpu_custom_call.1} parent=1 // pred_check_branch
      %60 = sbr.rel (0) target = $region25
    $region24: #{tpu_custom_call.1} parent=1 // pred_region
      %62 = vsyncadd [#allocation9], 0
      %s63 = sshll.u32 %s5, 4
      %s64 = int_to_ptr.hbm [resolvable:$true] %s63
      %s65 = sshll.u32 [#allocation8], 4
      %s66 = int_to_ptr.vmem [resolvable:$true] %s65
      %71 = dma.hbm_to_vmem [thread:$0]  %s64, 1024, %s66, [#allocation9], 64, 64, 4
    $region25: #{tpu_custom_call.1} parent=1 // pred_fallthru
      _
    // Predicated region
    $region26: #{tpu_custom_call.1} parent=1 // pred_check
      _
    $region27: #{tpu_custom_call.1} parent=1 // pred_check_branch
      %73 = sbr.rel (0) target = $region29
    $region28: #{tpu_custom_call.1} parent=1 // pred_region
      _
    $region29: #{tpu_custom_call.1} parent=1 // pred_fallthru
      _
    // Predicated region
    $region30: #{tpu_custom_call.1} parent=1 // pred_check
      _
    $region31: #{tpu_custom_call.1} parent=1 // pred_check_branch
      %75 = sbr.rel (0) target = $region33
    $region32: #{tpu_custom_call.1} parent=1 // pred_region
      %77 = dma.done [#allocation3], 128
    $region33: #{tpu_custom_call.1} parent=1 // pred_fallthru
      _
    // Predicated region
    $region34: #{tpu_custom_call.1} parent=1 // pred_check
      _
    $region35: #{tpu_custom_call.1} parent=1 // pred_check_branch
      %79 = sbr.rel (0) target = $region37
    $region36: #{tpu_custom_call.1} parent=1 // pred_region
      %81 = dma.done [#allocation6], 256
    $region37: #{tpu_custom_call.1} parent=1 // pred_fallthru
      _
    // Predicated region
    $region38: #{tpu_custom_call.1} parent=1 // pred_check
      _
    $region39: #{tpu_custom_call.1} parent=1 // pred_check_branch
      %83 = sbr.rel (0) target = $region41
    $region40: #{tpu_custom_call.1} parent=1 // pred_region
      %85 = dma.done [#allocation6], 1024
    $region41: #{tpu_custom_call.1} parent=1 // pred_fallthru
      _
    // Predicated region
    $region42: #{tpu_custom_call.1} parent=1 // pred_check
      _
    $region43: #{tpu_custom_call.1} parent=1 // pred_check_branch
      %87 = sbr.rel (0) target = $region45
    $region44: #{tpu_custom_call.1} parent=1 // pred_region
      %89 = dma.done [#allocation9], 1024
    $region45: #{tpu_custom_call.1} parent=1 // pred_fallthru
      _
    %v91 = vld [vmem:[#allocation2] sm:$0xff]
    %v92 = vpack.c.bf16 %v91, %v91
    %v93 = vld [vmem:[#allocation5] sm:$0xf]
    %v94 = vld [vmem:[#allocation5 + $0x4] sm:$0xf]
    %v95 = vld [vmem:[#allocation5 + $0x8] sm:$0xf]
    %v96 = vld [vmem:[#allocation5 + $0xc] sm:$0xf]
    %v97 = vld [vmem:[%s2] sm:$0x1]
    %v99 = vperm.slane %v97, 0
    %v105 = vunpack.c.l.b16 %v93
    %v106 = vunpack.c.l.b16 %v94
    %v107 = vunpack.c.l.b16 %v95
    %v108 = vunpack.c.l.b16 %v96
    %v109 = vpack.c.b16 %v106, %v105
    %v110 = vpack.c.b16 %v108, %v107
    %vm113 = vcmask 261120
    %v115 = vsel %vm113, %v92, 0
    %117 = vmatpush.bf16.msra.mxu0 0
    %118 = vmatpush.bf16.msra.mxu0 0
    %119 = vmatpush.bf16.msra.mxu0 0
    %120 = vmatpush.bf16.msra.mxu0 0
    %121 = vmatpush.bf16.msra.mxu0 0
    %122 = vmatpush.bf16.msra.mxu0 0
    %123 = vmatpush.bf16.msra.mxu0 %v110
    %124 = vmatpush.bf16.msra.mxu0 %v109
    %125 = vmatmul.bf16.gmra.mxu0 %v115
    %v126 = vpop.f32.mrf.mxu0
    %v127 = vadd.f32 %v99, %v126
    %v128 = vpop.f32.mrf.mxu0
    %129 = vdwg.mxu0
    %v130 = vmax.f32 %v127, 0.0
    %v131 = vpack.c.bf16 %v130, %v130
    %v132 = vld [vmem:[#allocation7] sm:$0xf]
    %v133 = vld [vmem:[#allocation7 + $0x4] sm:$0xf]
    %v134 = vld [vmem:[#allocation7 + $0x8] sm:$0xf]
    %v135 = vld [vmem:[#allocation7 + $0xc] sm:$0xf]
    %v136 = vld [vmem:[#allocation7 + $0x10] sm:$0xf]
    %v137 = vld [vmem:[#allocation7 + $0x14] sm:$0xf]
    %v138 = vld [vmem:[#allocation7 + $0x18] sm:$0xf]
    %v139 = vld [vmem:[#allocation7 + $0x1c] sm:$0xf]
    %v140 = vld [vmem:[#allocation7 + $0x20] sm:$0xf]
    %v141 = vld [vmem:[#allocation7 + $0x24] sm:$0xf]
    %v142 = vld [vmem:[#allocation7 + $0x28] sm:$0xf]
    %v143 = vld [vmem:[#allocation7 + $0x2c] sm:$0xf]
    %v144 = vld [vmem:[#allocation7 + $0x30] sm:$0xf]
    %v145 = vld [vmem:[#allocation7 + $0x34] sm:$0xf]
    %v146 = vld [vmem:[#allocation7 + $0x38] sm:$0xf]
    %v147 = vld [vmem:[#allocation7 + $0x3c] sm:$0xf]
    %v148 = vld [vmem:[%s4] sm:$0x1]
    %v150 = vperm.slane %v148, 0
    %v168 = vunpack.c.l.b16 %v132
    %v169 = vunpack.c.l.b16 %v133
    %v170 = vunpack.c.l.b16 %v134
    %v171 = vunpack.c.l.b16 %v135
    %v172 = vunpack.c.l.b16 %v136
    %v173 = vunpack.c.l.b16 %v137
    %v174 = vunpack.c.l.b16 %v138
    %v175 = vunpack.c.l.b16 %v139
    %v176 = vunpack.c.l.b16 %v140
    %v177 = vunpack.c.l.b16 %v141
    %v178 = vunpack.c.l.b16 %v142
    %v179 = vunpack.c.l.b16 %v143
    %v180 = vunpack.c.l.b16 %v144
    %v181 = vunpack.c.l.b16 %v145
    %v182 = vunpack.c.l.b16 %v146
    %v183 = vunpack.c.l.b16 %v147
    %v184 = vpack.c.b16 %v169, %v168
    %v185 = vpack.c.b16 %v171, %v170
    %v186 = vpack.c.b16 %v173, %v172
    %v187 = vpack.c.b16 %v175, %v174
    %v188 = vpack.c.b16 %v177, %v176
    %v189 = vpack.c.b16 %v179, %v178
    %v190 = vpack.c.b16 %v181, %v180
    %v191 = vpack.c.b16 %v183, %v182
    %200 = vmatpush.bf16.msra.mxu0 %v191
    %201 = vmatpush.bf16.msra.mxu0 %v190
    %202 = vmatpush.bf16.msra.mxu0 %v189
    %203 = vmatpush.bf16.msra.mxu0 %v188
    %204 = vmatpush.bf16.msra.mxu0 %v187
    %205 = vmatpush.bf16.msra.mxu0 %v186
    %206 = vmatpush.bf16.msra.mxu0 %v185
    %207 = vmatpush.bf16.msra.mxu0 %v184
    %208 = vmatmul.bf16.gmra.mxu0 %v131
    %v209 = vpop.f32.mrf.mxu0
    %v210 = vadd.f32 %v150, %v209
    %v211 = vpop.f32.mrf.mxu0
    %212 = vdwg.mxu0
    %v213 = vmax.f32 %v210, 0.0
    %v214 = vpack.c.bf16 %v213, %v213
    %v215 = vld [vmem:[#allocation8] sm:$0xf]
    %v216 = vld [vmem:[#allocation8 + $0x4] sm:$0xf]
    %v217 = vld [vmem:[#allocation8 + $0x8] sm:$0xf]
    %v218 = vld [vmem:[#allocation8 + $0xc] sm:$0xf]
    %v219 = vld [vmem:[#allocation8 + $0x10] sm:$0xf]
    %v220 = vld [vmem:[#allocation8 + $0x14] sm:$0xf]
    %v221 = vld [vmem:[#allocation8 + $0x18] sm:$0xf]
    %v222 = vld [vmem:[#allocation8 + $0x1c] sm:$0xf]
    %v223 = vld [vmem:[#allocation8 + $0x20] sm:$0xf]
    %v224 = vld [vmem:[#allocation8 + $0x24] sm:$0xf]
    %v225 = vld [vmem:[#allocation8 + $0x28] sm:$0xf]
    %v226 = vld [vmem:[#allocation8 + $0x2c] sm:$0xf]
    %v227 = vld [vmem:[#allocation8 + $0x30] sm:$0xf]
    %v228 = vld [vmem:[#allocation8 + $0x34] sm:$0xf]
    %v229 = vld [vmem:[#allocation8 + $0x38] sm:$0xf]
    %v230 = vld [vmem:[#allocation8 + $0x3c] sm:$0xf]
    %v231 = vld [vmem:[%s6] sm:$0x1]
    %v233 = vperm.slane %v231, 0
    %v251 = vunpack.c.l.b16 %v215
    %v252 = vunpack.c.l.b16 %v216
    %v253 = vunpack.c.l.b16 %v217
    %v254 = vunpack.c.l.b16 %v218
    %v255 = vunpack.c.l.b16 %v219
    %v256 = vunpack.c.l.b16 %v220
    %v257 = vunpack.c.l.b16 %v221
    %v258 = vunpack.c.l.b16 %v222
    %v259 = vunpack.c.l.b16 %v223
    %v260 = vunpack.c.l.b16 %v224
    %v261 = vunpack.c.l.b16 %v225
    %v262 = vunpack.c.l.b16 %v226
    %v263 = vunpack.c.l.b16 %v227
    %v264 = vunpack.c.l.b16 %v228
    %v265 = vunpack.c.l.b16 %v229
    %v266 = vunpack.c.l.b16 %v230
    %v267 = vpack.c.b16 %v252, %v251
    %v268 = vpack.c.b16 %v254, %v253
    %v269 = vpack.c.b16 %v256, %v255
    %v270 = vpack.c.b16 %v258, %v257
    %v271 = vpack.c.b16 %v260, %v259
    %v272 = vpack.c.b16 %v262, %v261
    %v273 = vpack.c.b16 %v264, %v263
    %v274 = vpack.c.b16 %v266, %v265
    %283 = vmatpush.bf16.msra.mxu0 %v274
    %284 = vmatpush.bf16.msra.mxu0 %v273
    %285 = vmatpush.bf16.msra.mxu0 %v272
    %286 = vmatpush.bf16.msra.mxu0 %v271
    %287 = vmatpush.bf16.msra.mxu0 %v270
    %288 = vmatpush.bf16.msra.mxu0 %v269
    %289 = vmatpush.bf16.msra.mxu0 %v268
    %290 = vmatpush.bf16.msra.mxu0 %v267
    %291 = vmatmul.bf16.gmra.mxu0 %v214
    %v292 = vpop.f32.mrf.mxu0
    %v293 = vadd.f32 %v233, %v292
    %v294 = vpop.f32.mrf.mxu0
    %295 = vdwg.mxu0
    %296 = vst [vmem:[#allocation10] sm:$0xff] %v293
    // Predicated region
    $region46: #{tpu_custom_call.1} parent=1 // pred_check
      _
    $region47: #{tpu_custom_call.1} parent=1 // pred_check_branch
      %298 = sbr.rel (0) target = $region49
    $region48: #{tpu_custom_call.1} parent=1 // pred_region
      %300 = vsyncadd [#allocation4], 64
      %s301 = sshll.u32 [#allocation10], 4
      %s302 = int_to_ptr.vmem [resolvable:$true] %s301
      %s303 = sshll.u32 %s7, 4
      %s304 = int_to_ptr.hbm [resolvable:$true] %s303
      %309 = dma.vmem_to_hbm [thread:$0]  %s302, 64, %s304, [#allocation4], 64, 64, 4
    $region49: #{tpu_custom_call.1} parent=1 // pred_fallthru
      _
    // Predicated region
    $region50: #{tpu_custom_call.1} parent=1 // pred_check
      _
    $region51: #{tpu_custom_call.1} parent=1 // pred_check_branch
      %311 = sbr.rel (0) target = $region53
    $region52: #{tpu_custom_call.1} parent=1 // pred_region
      %313 = dma.done [#allocation4], 128
    $region53: #{tpu_custom_call.1} parent=1 // pred_fallthru
      _
    %314 = vsyncpa [#allocation3], 1
    %315 = vsyncpa [#allocation6], 1
    %316 = vsyncpa [#allocation9], 1
    %317 = vsyncpa [#allocation4], 1

</llo_original>
